<compile_context>
chip_gen: v6e
topology: v6e:2x2x1
jax: 0.10.0
libtpu: 0.0.40
codegen_flags: <defaults>
</compile_context>

<pallas_src>
import numpy as np
import jax
import jax.numpy as jnp
from jax.experimental import pallas as pl
from jax.experimental.pallas import tpu as pltpu

_NEG = -100000000.0
_REF_PRECISION = jax.lax.Precision.HIGHEST   # reference only (mirrors f32 PyTorch math)


def _round_up(x, m):
    return -(-x // m) * m


# ----------------------------------------------------------------------------
# Pallas kernel: fused bidirectional recurrence over one time-chunk of Gx.
# Grid = (batch_blocks, time_chunks).  h/c/(running max) live in scratch across
# the time axis; Gx chunks are streamed in by the BlockSpec pipeline.
# ----------------------------------------------------------------------------
def _make_bilstm_kernel(t_chunk, H, pool):
    """H here is the padded (lane-aligned) hidden size."""

    def kernel(len_ref, gxf_ref, gxb_ref, whh_f_ref, whh_b_ref, out_ref,
               h_scr, c_scr, *rest):
        run_scr = rest[0] if pool else None
        t_idx = pl.program_id(1)
        n_tc = pl.num_programs(1)
        Tp = n_tc * t_chunk

        @pl.when(t_idx == 0)
        def _init():
            h_scr[...] = jnp.zeros_like(h_scr)
            c_scr[...] = jnp.zeros_like(c_scr)
            if pool:
                run_scr[...] = jnp.full_like(run_scr, _NEG)

        lens = len_ref[...]                      # (b_block, 1) int32, loaded once
        t_base = t_idx * t_chunk

        def halfcell(gx, h, c, whh_ref):
            # bf16 MXU inputs, f32 accumulate; gate elementwise math stays f32.
            gates = gx.astype(jnp.float32) + jnp.dot(
                h.astype(jnp.bfloat16), whh_ref[...],
                preferred_element_type=jnp.float32)
            i = jax.nn.sigmoid(gates[:, 0 * H:1 * H])
            f = jax.nn.sigmoid(gates[:, 1 * H:2 * H])
            g = jnp.tanh(gates[:, 2 * H:3 * H])
            o = jax.nn.sigmoid(gates[:, 3 * H:4 * H])
            c_new = f * c + i * g
            h_new = o * jnp.tanh(c_new)
            return h_new, c_new

        def step(s, carry):
            tf = t_base + s                      # forward global timestep
            tb = Tp - 1 - tf                     # backward global timestep

            hf, cf = halfcell(gxf_ref[s], h_scr[:, 0:H], c_scr[:, 0:H], whh_f_ref)
            hb, cb = halfcell(gxb_ref[t_chunk - 1 - s],
                              h_scr[:, H:2 * H], c_scr[:, H:2 * H], whh_b_ref)

            vf = tf < lens                       # (b_block, 1): freeze padded rows/steps
            vb = tb < lens
            h_scr[:, 0:H] = jnp.where(vf, hf, h_scr[:, 0:H])
            c_scr[:, 0:H] = jnp.where(vf, cf, c_scr[:, 0:H])
            h_scr[:, H:2 * H] = jnp.where(vb, hb, h_scr[:, H:2 * H])
            c_scr[:, H:2 * H] = jnp.where(vb, cb, c_scr[:, H:2 * H])

            if pool:
                # Online masked max: reproduces max_t(where(X == 0, -1e8, X)).
                cand_f = jnp.where(vf & (hf != 0.0), hf, _NEG)
                cand_b = jnp.where(vb & (hb != 0.0), hb, _NEG)
                run_scr[:, 0:H] = jnp.maximum(run_scr[:, 0:H], cand_f)
                run_scr[:, H:2 * H] = jnp.maximum(run_scr[:, H:2 * H], cand_b)
            return carry

        # unroll=1: with b_block=128 the per-step live set already fills the vreg
        # file; the two independent direction chains give the scheduler its overlap.
        jax.lax.fori_loop(0, t_chunk, step, 0, unroll=1)

        @pl.when(t_idx == n_tc - 1)
        def _finalize():
            # Lane-dense (b_block, 2Hp) store, 2Hp a multiple of 128.
            out_ref[...] = run_scr[...] if pool else h_scr[...]

    return kernel


# ----------------------------------------------------------------------------
# VMEM sizing helper (pads to the per-dtype (sublane, 128) tile)
# ----------------------------------------------------------------------------
def _buf_bytes(shape, itemsize):
    s = list(shape)
    if len(s) == 1:
        s = [1] + s
    sub = {4: 8, 2: 16, 1: 32}[itemsize]
    s = s[:-2] + [_round_up(s[-2], sub), _round_up(s[-1], 128)]
    n = 1
    for d in s:
        n *= d
    return n * itemsize


# ----------------------------------------------------------------------------
# Wrapper
# ----------------------------------------------------------------------------
def bilstm_forward(sent, sent_len, kparams, pool, *, b_block=128, t_chunk=8):
    """sent: (T, B, E) f32; sent_len: (B,) int; pool: 0 (concat hn) or 1 (max-pool)."""
    T, B, E = sent.shape
    H, Hp = kparams["H"], kparams["Hp"]

    # Batch tiling: large M fills the MXU; never pad past what the batch needs.
    b_block = max(8, min(b_block, _round_up(B, 8)))
    n_blk = pl.cdiv(B, b_block)
    Bp = n_blk * b_block
    # TODO(synk): on v7x (2 TCs) force n_blk >= 2 when B > b_block so the "parallel"
    #             batch axis actually spans both cores.

    # Time chunking: Gx is streamed per chunk (double-buffered by the BlockSpec pipeline).
    t_chunk = max(1, min(t_chunk, T))
    n_tc = pl.cdiv(T, t_chunk)
    Tp = n_tc * t_chunk

    x = jnp.zeros((Tp, Bp, E), jnp.float32).at[:T, :B, :].set(sent)
    lens = jnp.zeros((Bp, 1), jnp.int32).at[:B, 0].set(sent_len.astype(jnp.int32))

    # Hoisted input projection: ONE plain-XLA GEMM fused across both directions
    # (bf16 MXU inputs, f32 accumulate, biases folded in), result stored in bf16.
    wih_cat = jnp.concatenate([kparams["wih_f_T"], kparams["wih_b_T"]], axis=1)  # (E, 8Hp) bf16
    b_cat = jnp.concatenate([kparams["b_f"], kparams["b_b"]], axis=1)            # (1, 8Hp) f32
    gx = (jnp.dot(x.reshape(Tp * Bp, E).astype(jnp.bfloat16), wih_cat,
                  preferred_element_type=jnp.float32) + b_cat)
    gx = gx.reshape(Tp, Bp, 8 * Hp).astype(jnp.bfloat16)   # fwd gates [:4Hp], bwd [4Hp:]

    kernel = _make_bilstm_kernel(t_chunk, Hp, pool)

    scratch = [pltpu.VMEM((b_block, 2 * Hp), jnp.float32),      # h  (fwd | bwd)
               pltpu.VMEM((b_block, 2 * Hp), jnp.float32)]      # c  (fwd | bwd)
    if pool:
        scratch.append(pltpu.VMEM((b_block, 2 * Hp), jnp.float32))  # running max

    # ---- VMEM budget: double-buffered inputs/outputs + resident scratch,
    #      with a generation-aware cap (never request the whole physical VMEM).
    in_bufs = [((b_block, 1), 4),
               ((t_chunk, b_block, 4 * Hp), 2),
               ((t_chunk, b_block, 4 * Hp), 2),
               ((Hp, 4 * Hp), 2),
               ((Hp, 4 * Hp), 2)]
    out_bufs = [((b_block, 2 * Hp), 4)]
    scr_bufs = [((b_block, 2 * Hp), 4)] * (3 if pool else 2)
    need = (2 * sum(_buf_bytes(s, i) for s, i in in_bufs)
            + 2 * sum(_buf_bytes(s, i) for s, i in out_bufs)
            + sum(_buf_bytes(s, i) for s, i in scr_bufs))
    try:
        phys = pltpu.get_tpu_info().vmem_capacity_bytes
    except Exception:
        phys = 64 * 1024 * 1024                  # assume smallest (v7x per-core VMEM)
    vmem_limit = int(min(0.8 * phys, max(32 * 1024 * 1024, 1.5 * need + (8 << 20))))

    out = pl.pallas_call(
        kernel,
        out_shape=jax.ShapeDtypeStruct((Bp, 2 * Hp), jnp.float32),
        grid=(n_blk, n_tc),
        in_specs=[
            pl.BlockSpec((b_block, 1), lambda i, t: (i, 0)),                      # lengths
            pl.BlockSpec((t_chunk, b_block, 4 * Hp), lambda i, t: (t, i, 0)),     # Gx fwd chunk
            pl.BlockSpec((t_chunk, b_block, 4 * Hp),
                         lambda i, t: (n_tc - 1 - t, i, 1)),                      # Gx bwd chunk
            # TODO(synk): single-buffer these constant-index weights via
            #             pipeline_mode=pl.Buffered(1) once broadly supported.
            pl.BlockSpec((Hp, 4 * Hp), lambda i, t: (0, 0)),                      # W_hh fwd (bf16)
            pl.BlockSpec((Hp, 4 * Hp), lambda i, t: (0, 0)),                      # W_hh bwd (bf16)
        ],
        out_specs=pl.BlockSpec((b_block, 2 * Hp), lambda i, t: (i, 0)),
        scratch_shapes=scratch,
        compiler_params=pltpu.CompilerParams(
            dimension_semantics=("parallel", "arbitrary"),   # batch split across TCs
            vmem_limit_bytes=vmem_limit),
    )(lens, gx, gx, kparams["whh_f_T"], kparams["whh_b_T"])

    # Strip batch padding and the per-gate H padding.
    return jnp.concatenate([out[:B, :H], out[:B, Hp:Hp + H]], axis=1)


# ----------------------------------------------------------------------------
# Parameter init (PyTorch nn.LSTM default U(-1/sqrt(H), 1/sqrt(H))) + kernel prep
# ----------------------------------------------------------------------------
def init_params(key, E, H):
    k = 1.0 / np.sqrt(H)
    ks = jax.random.split(key, 8)
    u = lambda kk, shp: jax.random.uniform(kk, shp, jnp.float32, -k, k)
    # PyTorch stores W_ih (4H, E), W_hh (4H, H), b_ih (4H,), b_hh (4H,) per direction.
    return {
        "w_ih_f": u(ks[0], (4 * H, E)), "w_hh_f": u(ks[1], (4 * H, H)),
        "b_ih_f": u(ks[2], (4 * H,)), "b_hh_f": u(ks[3], (4 * H,)),
        "w_ih_b": u(ks[4], (4 * H, E)), "w_hh_b": u(ks[5], (4 * H, H)),
        "b_ih_b": u(ks[6], (4 * H,)), "b_hh_b": u(ks[7], (4 * H,)),
    }


def _pad_gate_cols(w, H, Hp):
    """Pad the trailing 4H (gate-ordered i,f,g,o) axis to 4*Hp, zero-padding each gate."""
    lead = w.shape[:-1]
    w = w.reshape(lead + (4, H))
    w = jnp.pad(w, [(0, 0)] * len(lead) + [(0, 0), (0, Hp - H)])
    return w.reshape(lead + (4 * Hp,))


def prep_kernel_params(p, E, H):
    Hp = _round_up(H, 128)                        # lane-aligned gate slices
    wih_f = _pad_gate_cols(p["w_ih_f"].T, H, Hp).astype(jnp.bfloat16)          # (E, 4Hp)
    wih_b = _pad_gate_cols(p["w_ih_b"].T, H, Hp).astype(jnp.bfloat16)
    whh_f = jnp.pad(_pad_gate_cols(p["w_hh_f"].T, H, Hp),
                    [(0, Hp - H), (0, 0)]).astype(jnp.bfloat16)                # (Hp, 4Hp)
    whh_b = jnp.pad(_pad_gate_cols(p["w_hh_b"].T, H, Hp),
                    [(0, Hp - H), (0, 0)]).astype(jnp.bfloat16)
    b_f = _pad_gate_cols((p["b_ih_f"] + p["b_hh_f"]).reshape(1, 4 * H), H, Hp)  # (1, 4Hp) f32
    b_b = _pad_gate_cols((p["b_ih_b"] + p["b_hh_b"]).reshape(1, 4 * H), H, Hp)
    return {"wih_f_T": wih_f, "whh_f_T": whh_f, "b_f": b_f,
            "wih_b_T": wih_b, "whh_b_T": whh_b, "b_b": b_b,
            "H": H, "Hp": Hp}


# ----------------------------------------------------------------------------
# Pure-JAX reference (mirrors PyTorch pack/pad semantics via length masking)
# ----------------------------------------------------------------------------
def ref_forward(x, lens, p, pool):
    T, B, _ = x.shape
    H = p["w_hh_f"].shape[1]
    lens = lens.reshape(B, 1)
    dot = lambda a, b: jnp.dot(a, b, precision=_REF_PRECISION)

    wih_f, whh_f = p["w_ih_f"].T, p["w_hh_f"].T
    b_f = (p["b_ih_f"] + p["b_hh_f"]).reshape(1, 4 * H)
    wih_b, whh_b = p["w_ih_b"].T, p["w_hh_b"].T
    b_b = (p["b_ih_b"] + p["b_hh_b"]).reshape(1, 4 * H)

    def cell(x_t, h, c, wih, whh, b):
        gates = (dot(x_t, wih) + b) + dot(h, whh)
        i, f, g, o = jnp.split(gates, 4, axis=1)
        c_new = jax.nn.sigmoid(f) * c + jax.nn.sigmoid(i) * jnp.tanh(g)
        h_new = jax.nn.sigmoid(o) * jnp.tanh(c_new)
        return h_new, c_new

    h = jnp.zeros((B, H), jnp.float32); c = jnp.zeros((B, H), jnp.float32)
    Xf = []
    for t in range(T):
        hn, cn = cell(x[t], h, c, wih_f, whh_f, b_f)
        valid = t < lens
        Xf.append(jnp.where(valid, hn, 0.0))
        h = jnp.where(valid, hn, h); c = jnp.where(valid, cn, c)
    hT_f = h

    h = jnp.zeros((B, H), jnp.float32); c = jnp.zeros((B, H), jnp.float32)
    Xb = [None] * T
    for t in range(T - 1, -1, -1):
        hn, cn = cell(x[t], h, c, wih_b, whh_b, b_b)
        valid = t < lens
        Xb[t] = jnp.where(valid, hn, 0.0)
        h = jnp.where(valid, hn, h); c = jnp.where(valid, cn, c)
    hT_b = h

    if pool == 0:
        return jnp.concatenate([hT_f, hT_b], axis=1)
    X = jnp.concatenate([jnp.stack(Xf), jnp.stack(Xb)], axis=-1)   # (T, B, 2H)
    return jnp.max(jnp.where(X == 0.0, _NEG, X), axis=0)


# ----------------------------------------------------------------------------
if __name__ == "__main__":
    config = {"b_size": 2, "emb_dim": 16, "lstm_dim": 32, "model_name": "bilstm"}
    T, B, E, H = 8, config["b_size"], config["emb_dim"], config["lstm_dim"]

    key = jax.random.PRNGKey(0)
    kx, kp = jax.random.split(key)
    sent = jax.random.normal(kx, (T, B, E), jnp.float32)
    sent_len = jnp.array([8, 5], jnp.int32)            # variable lengths (B,)
    # zero out padded positions (as a padded batch would have)
    tmask = (jnp.arange(T)[:, None] < sent_len[None, :]).astype(jnp.float32)
    sent = sent * tmask[:, :, None]

    raw = init_params(kp, E, H)
    kparams = prep_kernel_params(raw, E, H)

    # pool = 0 ('bilstm'): concat of final hidden states
    emb0 = jax.block_until_ready(bilstm_forward(sent, sent_len, kparams, pool=0))
    # pool = 1 ('bilstm_pool'): masked max-pool over time
    emb1 = jax.block_until_ready(bilstm_forward(sent, sent_len, kparams, pool=1))

    ref0 = ref_forward(sent, sent_len, raw, 0)
    ref1 = ref_forward(sent, sent_len, raw, 1)

    assert emb0.shape == (B, 2 * H) and emb1.shape == (B, 2 * H)
    # Tolerance loosened vs the f32 reference: kernel uses single-pass bf16 MXU inputs
    # with f32 accumulation through the recurrence.
    np.testing.assert_allclose(np.asarray(emb0), np.asarray(ref0), rtol=2e-2, atol=2e-2)
    np.testing.assert_allclose(np.asarray(emb1), np.asarray(ref1), rtol=2e-2, atol=2e-2)

    print("KERNEL_OK")
</pallas_src>

<mosaic_0001>
module attributes {stable_mosaic.version = 11 : i64} {
  func.func @kernel(%arg0: i32, %arg1: i32, %arg2: memref<8x1xi32, #tpu.memory_space<vmem>>, %arg3: memref<8x8x512xbf16, #tpu.memory_space<vmem>>, %arg4: memref<8x8x512xbf16, #tpu.memory_space<vmem>>, %arg5: memref<128x512xbf16, #tpu.memory_space<vmem>>, %arg6: memref<128x512xbf16, #tpu.memory_space<vmem>>, %arg7: memref<8x256xf32, #tpu.memory_space<vmem>>, %arg8: memref<8x256xf32, #tpu.memory_space<vmem>>, %arg9: memref<8x256xf32, #tpu.memory_space<vmem>>) attributes {dimension_semantics = [#tpu.dimension_semantics<parallel>, #tpu.dimension_semantics<arbitrary>], iteration_bounds = array<i64: 1, 1>, scalar_prefetch = 0 : i64, scratch_operands = 2 : i64, tpu.core_type = #tpu.core_type<tc>, window_params = [{transform_indices = @transform_0, window_bounds = array<i64: 8, 1>}, {transform_indices = @transform_1, window_bounds = array<i64: 8, 8, 512>}, {transform_indices = @transform_2, window_bounds = array<i64: 8, 8, 512>}, {pipeline_mode = #tpu.pipeline_mode<synchronous>, transform_indices = @transform_3, window_bounds = array<i64: 128, 512>}, {pipeline_mode = #tpu.pipeline_mode<synchronous>, transform_indices = @transform_4, window_bounds = array<i64: 128, 512>}, {transform_indices = @transform_5, window_bounds = array<i64: 8, 256>}]} {
    %c0_i32 = arith.constant 0 : i32
    %0 = arith.cmpi eq, %arg1, %c0_i32 : i32
    %1 = arith.extui %0 : i1 to i32
    %c0_i32_0 = arith.constant 0 : i32
    %2 = arith.cmpi ne, %1, %c0_i32_0 : i32
    scf.if %2 {
      %cst = arith.constant 0.000000e+00 : f32
      %9 = vector.broadcast %cst : f32 to vector<8x256xf32>
      %c0_7 = arith.constant 0 : index
      %c0_8 = arith.constant 0 : index
      %10 = vector.load %arg8[%c0_7, %c0_8] : memref<8x256xf32, #tpu.memory_space<vmem>>, vector<8x256xf32>
      tpu.vector_store %arg8[%c0_7, %c0_8], %9 {strides = array<i32>} : memref<8x256xf32, #tpu.memory_space<vmem>>, vector<8x256xf32>,
      %cst_9 = arith.constant 0.000000e+00 : f32
      %11 = vector.broadcast %cst_9 : f32 to vector<8x256xf32>
      %c0_10 = arith.constant 0 : index
      %c0_11 = arith.constant 0 : index
      %12 = vector.load %arg9[%c0_10, %c0_11] : memref<8x256xf32, #tpu.memory_space<vmem>>, vector<8x256xf32>
      tpu.vector_store %arg9[%c0_10, %c0_11], %11 {strides = array<i32>} : memref<8x256xf32, #tpu.memory_space<vmem>>, vector<8x256xf32>,
    } else {
    }
    %c0 = arith.constant 0 : index
    %c0_1 = arith.constant 0 : index
    %3 = vector.load %arg2[%c0, %c0_1] : memref<8x1xi32, #tpu.memory_space<vmem>>, vector<8x1xi32>
    %c8_i32 = arith.constant 8 : i32
    %4 = arith.muli %arg1, %c8_i32 : i32
    %c0_i32_2 = arith.constant 0 : i32
    %c8_i32_3 = arith.constant 8 : i32
    %5 = arith.addi %c0_i32_2, %c8_i32_3 : i32
    %c1_i32 = arith.constant 1 : i32
    scf.for %arg10 = %c0_i32_2 to %5 step %c1_i32  : i32 {
      %9 = arith.addi %4, %arg10 : i32
      %c7_i32 = arith.constant 7 : i32
      %10 = arith.subi %c7_i32, %9 : i32
      %11 = arith.index_cast %arg10 : i32 to index
      %c0_7 = arith.constant 0 : index
      %c0_8 = arith.constant 0 : index
      %12 = vector.load %arg3[%11, %c0_7, %c0_8] : memref<8x8x512xbf16, #tpu.memory_space<vmem>>, vector<1x8x512xbf16>
      %13 = vector.shape_cast %12 : vector<1x8x512xbf16> to vector<8x512xbf16>
      %c0_9 = arith.constant 0 : index
      %c0_10 = arith.constant 0 : index
      %14 = vector.load %arg8[%c0_9, %c0_10] : memref<8x256xf32, #tpu.memory_space<vmem>>, vector<8x128xf32>
      %c0_11 = arith.constant 0 : index
      %c0_12 = arith.constant 0 : index
      %15 = vector.load %arg9[%c0_11, %c0_12] : memref<8x256xf32, #tpu.memory_space<vmem>>, vector<8x128xf32>
      %16 = arith.extf %13 : vector<8x512xbf16> to vector<8x512xf32>
      %17 = arith.truncf %14 : vector<8x128xf32> to vector<8x128xbf16>
      %c0_13 = arith.constant 0 : index
      %c0_14 = arith.constant 0 : index
      %18 = vector.load %arg5[%c0_13, %c0_14] : memref<128x512xbf16, #tpu.memory_space<vmem>>, vector<128x512xbf16>
      %cst = arith.constant dense<0.000000e+00> : vector<8x512xf32>
      %19 = tpu.matmul %17, %18, %cst {dimension_numbers = #tpu.dot_dimension_numbers<[1], [0], [0], [1], [0, 0, 1, 1], [], []>} : vector<8x128xbf16>, vector<128x512xbf16>, vector<8x512xf32> -> vector<8x512xf32>
      %20 = arith.addf %16, %19 : vector<8x512xf32>
      %21 = vector.extract_strided_slice %20 {offsets = [0, 0], sizes = [8, 128], strides = [1, 1]} : vector<8x512xf32> to vector<8x128xf32>
      %22 = arith.negf %21 : vector<8x128xf32>
      %23 = math.exp %22 : vector<8x128xf32>
      %cst_15 = arith.constant 1.000000e+00 : f32
      %24 = vector.broadcast %cst_15 : f32 to vector<8x128xf32>
      %25 = arith.addf %24, %23 : vector<8x128xf32>
      %26 = arith.divf %24, %25 : vector<8x128xf32>
      %27 = vector.extract_strided_slice %20 {offsets = [0, 128], sizes = [8, 128], strides = [1, 1]} : vector<8x512xf32> to vector<8x128xf32>
      %28 = arith.negf %27 : vector<8x128xf32>
      %29 = math.exp %28 : vector<8x128xf32>
      %cst_16 = arith.constant 1.000000e+00 : f32
      %30 = vector.broadcast %cst_16 : f32 to vector<8x128xf32>
      %31 = arith.addf %30, %29 : vector<8x128xf32>
      %32 = arith.divf %30, %31 : vector<8x128xf32>
      %33 = vector.extract_strided_slice %20 {offsets = [0, 256], sizes = [8, 128], strides = [1, 1]} : vector<8x512xf32> to vector<8x128xf32>
      %34 = math.tanh %33 : vector<8x128xf32>
      %35 = vector.extract_strided_slice %20 {offsets = [0, 384], sizes = [8, 128], strides = [1, 1]} : vector<8x512xf32> to vector<8x128xf32>
      %36 = arith.negf %35 : vector<8x128xf32>
      %37 = math.exp %36 : vector<8x128xf32>
      %cst_17 = arith.constant 1.000000e+00 : f32
      %38 = vector.broadcast %cst_17 : f32 to vector<8x128xf32>
      %39 = arith.addf %38, %37 : vector<8x128xf32>
      %40 = arith.divf %38, %39 : vector<8x128xf32>
      %41 = arith.mulf %32, %15 : vector<8x128xf32>
      %42 = arith.mulf %26, %34 : vector<8x128xf32>
      %43 = arith.addf %41, %42 : vector<8x128xf32>
      %44 = math.tanh %43 : vector<8x128xf32>
      %45 = arith.mulf %40, %44 : vector<8x128xf32>
      %c7_i32_18 = arith.constant 7 : i32
      %46 = arith.subi %c7_i32_18, %arg10 : i32
      %47 = arith.index_cast %46 : i32 to index
      %c0_19 = arith.constant 0 : index
      %c0_20 = arith.constant 0 : index
      %48 = vector.load %arg4[%47, %c0_19, %c0_20] : memref<8x8x512xbf16, #tpu.memory_space<vmem>>, vector<1x8x512xbf16>
      %49 = vector.shape_cast %48 : vector<1x8x512xbf16> to vector<8x512xbf16>
      %c0_21 = arith.constant 0 : index
      %c128 = arith.constant 128 : index
      %50 = vector.load %arg8[%c0_21, %c128] : memref<8x256xf32, #tpu.memory_space<vmem>>, vector<8x128xf32>
      %c0_22 = arith.constant 0 : index
      %c128_23 = arith.constant 128 : index
      %51 = vector.load %arg9[%c0_22, %c128_23] : memref<8x256xf32, #tpu.memory_space<vmem>>, vector<8x128xf32>
      %52 = arith.extf %49 : vector<8x512xbf16> to vector<8x512xf32>
      %53 = arith.truncf %50 : vector<8x128xf32> to vector<8x128xbf16>
      %c0_24 = arith.constant 0 : index
      %c0_25 = arith.constant 0 : index
      %54 = vector.load %arg6[%c0_24, %c0_25] : memref<128x512xbf16, #tpu.memory_space<vmem>>, vector<128x512xbf16>
      %cst_26 = arith.constant dense<0.000000e+00> : vector<8x512xf32>
      %55 = tpu.matmul %53, %54, %cst_26 {dimension_numbers = #tpu.dot_dimension_numbers<[1], [0], [0], [1], [0, 0, 1, 1], [], []>} : vector<8x128xbf16>, vector<128x512xbf16>, vector<8x512xf32> -> vector<8x512xf32>
      %56 = arith.addf %52, %55 : vector<8x512xf32>
      %57 = vector.extract_strided_slice %56 {offsets = [0, 0], sizes = [8, 128], strides = [1, 1]} : vector<8x512xf32> to vector<8x128xf32>
      %58 = arith.negf %57 : vector<8x128xf32>
      %59 = math.exp %58 : vector<8x128xf32>
      %cst_27 = arith.constant 1.000000e+00 : f32
      %60 = vector.broadcast %cst_27 : f32 to vector<8x128xf32>
      %61 = arith.addf %60, %59 : vector<8x128xf32>
      %62 = arith.divf %60, %61 : vector<8x128xf32>
      %63 = vector.extract_strided_slice %56 {offsets = [0, 128], sizes = [8, 128], strides = [1, 1]} : vector<8x512xf32> to vector<8x128xf32>
      %64 = arith.negf %63 : vector<8x128xf32>
      %65 = math.exp %64 : vector<8x128xf32>
      %cst_28 = arith.constant 1.000000e+00 : f32
      %66 = vector.broadcast %cst_28 : f32 to vector<8x128xf32>
      %67 = arith.addf %66, %65 : vector<8x128xf32>
      %68 = arith.divf %66, %67 : vector<8x128xf32>
      %69 = vector.extract_strided_slice %56 {offsets = [0, 256], sizes = [8, 128], strides = [1, 1]} : vector<8x512xf32> to vector<8x128xf32>
      %70 = math.tanh %69 : vector<8x128xf32>
      %71 = vector.extract_strided_slice %56 {offsets = [0, 384], sizes = [8, 128], strides = [1, 1]} : vector<8x512xf32> to vector<8x128xf32>
      %72 = arith.negf %71 : vector<8x128xf32>
      %73 = math.exp %72 : vector<8x128xf32>
      %cst_29 = arith.constant 1.000000e+00 : f32
      %74 = vector.broadcast %cst_29 : f32 to vector<8x128xf32>
      %75 = arith.addf %74, %73 : vector<8x128xf32>
      %76 = arith.divf %74, %75 : vector<8x128xf32>
      %77 = arith.mulf %68, %51 : vector<8x128xf32>
      %78 = arith.mulf %62, %70 : vector<8x128xf32>
      %79 = arith.addf %77, %78 : vector<8x128xf32>
      %80 = math.tanh %79 : vector<8x128xf32>
      %81 = arith.mulf %76, %80 : vector<8x128xf32>
      %82 = vector.broadcast %9 : i32 to vector<8x1xi32>
      %83 = arith.cmpi slt, %82, %3 : vector<8x1xi32>
      %84 = vector.broadcast %10 : i32 to vector<8x1xi32>
      %85 = arith.cmpi slt, %84, %3 : vector<8x1xi32>
      %c0_30 = arith.constant 0 : index
      %c0_31 = arith.constant 0 : index
      %86 = vector.load %arg8[%c0_30, %c0_31] : memref<8x256xf32, #tpu.memory_space<vmem>>, vector<8x128xf32>
      %87 = vector.shape_cast %83 : vector<8x1xi1> to vector<8x1xi1>
      %88 = vector.broadcast %87 : vector<8x1xi1> to vector<8x128xi1>
      %89 = arith.select %88, %45, %86 : vector<8x128xi1>, vector<8x128xf32>
      %c0_32 = arith.constant 0 : index
      %c0_33 = arith.constant 0 : index
      %90 = vector.load %arg8[%c0_32, %c0_33] : memref<8x256xf32, #tpu.memory_space<vmem>>, vector<8x128xf32>
      tpu.vector_store %arg8[%c0_32, %c0_33], %89 {strides = array<i32>} : memref<8x256xf32, #tpu.memory_space<vmem>>, vector<8x128xf32>,
      %c0_34 = arith.constant 0 : index
      %c0_35 = arith.constant 0 : index
      %91 = vector.load %arg9[%c0_34, %c0_35] : memref<8x256xf32, #tpu.memory_space<vmem>>, vector<8x128xf32>
      %92 = vector.shape_cast %83 : vector<8x1xi1> to vector<8x1xi1>
      %93 = vector.broadcast %92 : vector<8x1xi1> to vector<8x128xi1>
      %94 = arith.select %93, %43, %91 : vector<8x128xi1>, vector<8x128xf32>
      %c0_36 = arith.constant 0 : index
      %c0_37 = arith.constant 0 : index
      %95 = vector.load %arg9[%c0_36, %c0_37] : memref<8x256xf32, #tpu.memory_space<vmem>>, vector<8x128xf32>
      tpu.vector_store %arg9[%c0_36, %c0_37], %94 {strides = array<i32>} : memref<8x256xf32, #tpu.memory_space<vmem>>, vector<8x128xf32>,
      %c0_38 = arith.constant 0 : index
      %c128_39 = arith.constant 128 : index
      %96 = vector.load %arg8[%c0_38, %c128_39] : memref<8x256xf32, #tpu.memory_space<vmem>>, vector<8x128xf32>
      %97 = vector.shape_cast %85 : vector<8x1xi1> to vector<8x1xi1>
      %98 = vector.broadcast %97 : vector<8x1xi1> to vector<8x128xi1>
      %99 = arith.select %98, %81, %96 : vector<8x128xi1>, vector<8x128xf32>
      %c0_40 = arith.constant 0 : index
      %c128_41 = arith.constant 128 : index
      %100 = vector.load %arg8[%c0_40, %c128_41] : memref<8x256xf32, #tpu.memory_space<vmem>>, vector<8x128xf32>
      tpu.vector_store %arg8[%c0_40, %c128_41], %99 {strides = array<i32>} : memref<8x256xf32, #tpu.memory_space<vmem>>, vector<8x128xf32>,
      %c0_42 = arith.constant 0 : index
      %c128_43 = arith.constant 128 : index
      %101 = vector.load %arg9[%c0_42, %c128_43] : memref<8x256xf32, #tpu.memory_space<vmem>>, vector<8x128xf32>
      %102 = vector.shape_cast %85 : vector<8x1xi1> to vector<8x1xi1>
      %103 = vector.broadcast %102 : vector<8x1xi1> to vector<8x128xi1>
      %104 = arith.select %103, %79, %101 : vector<8x128xi1>, vector<8x128xf32>
      %c0_44 = arith.constant 0 : index
      %c128_45 = arith.constant 128 : index
      %105 = vector.load %arg9[%c0_44, %c128_45] : memref<8x256xf32, #tpu.memory_space<vmem>>, vector<8x128xf32>
      tpu.vector_store %arg9[%c0_44, %c128_45], %104 {strides = array<i32>} : memref<8x256xf32, #tpu.memory_space<vmem>>, vector<8x128xf32>,
    }
    %c8_i32_4 = arith.constant 8 : i32
    %c0_i32_5 = arith.constant 0 : i32
    %6 = arith.cmpi eq, %arg1, %c0_i32_5 : i32
    %7 = arith.extui %6 : i1 to i32
    %c0_i32_6 = arith.constant 0 : i32
    %8 = arith.cmpi ne, %7, %c0_i32_6 : i32
    scf.if %8 {
      %c0_7 = arith.constant 0 : index
      %c0_8 = arith.constant 0 : index
      %9 = vector.load %arg8[%c0_7, %c0_8] : memref<8x256xf32, #tpu.memory_space<vmem>>, vector<8x256xf32>
      %c0_9 = arith.constant 0 : index
      %c0_10 = arith.constant 0 : index
      %10 = vector.load %arg7[%c0_9, %c0_10] : memref<8x256xf32, #tpu.memory_space<vmem>>, vector<8x256xf32>
      tpu.vector_store %arg7[%c0_9, %c0_10], %9 {strides = array<i32>} : memref<8x256xf32, #tpu.memory_space<vmem>>, vector<8x256xf32>,
    } else {
    }
    return
  }
  func.func @transform_0(%arg0: i32, %arg1: i32) -> (i32, i32) {
    %c0_i32 = arith.constant 0 : i32
    %c0_i32_0 = arith.constant 0 : i32
    return %arg0, %c0_i32 : i32, i32
  }
  func.func @transform_1(%arg0: i32, %arg1: i32) -> (i32, i32, i32) {
    %c0_i32 = arith.constant 0 : i32
    %c0_i32_0 = arith.constant 0 : i32
    return %arg1, %arg0, %c0_i32 : i32, i32, i32
  }
  func.func @transform_2(%arg0: i32, %arg1: i32) -> (i32, i32, i32) {
    %c0_i32 = arith.constant 0 : i32
    %0 = arith.subi %c0_i32, %arg1 : i32
    %c1_i32 = arith.constant 1 : i32
    %c0_i32_0 = arith.constant 0 : i32
    return %0, %arg0, %c1_i32 : i32, i32, i32
  }
  func.func @transform_3(%arg0: i32, %arg1: i32) -> (i32, i32) {
    %c0_i32 = arith.constant 0 : i32
    %c0_i32_0 = arith.constant 0 : i32
    %c0_i32_1 = arith.constant 0 : i32
    return %c0_i32, %c0_i32_0 : i32, i32
  }
  func.func @transform_4(%arg0: i32, %arg1: i32) -> (i32, i32) {
    %c0_i32 = arith.constant 0 : i32
    %c0_i32_0 = arith.constant 0 : i32
    %c0_i32_1 = arith.constant 0 : i32
    return %c0_i32, %c0_i32_0 : i32, i32
  }
  func.func @transform_5(%arg0: i32, %arg1: i32) -> (i32, i32) {
    %c0_i32 = arith.constant 0 : i32
    %c0_i32_0 = arith.constant 0 : i32
    return %arg0, %c0_i32 : i32, i32
  }
}

</mosaic_0001>

<llo_original>
// kernel: tpu_custom_call.1
$region0: #{tpu_custom_call.1}
  #allocation0 [shape = 'u32[]', space=smem, size = 0x4, offset = 0x4, fixed_abs, tag = 'smem constant byte address 0x4 - core index']
  #allocation1 [shape = 'u32[144,128]{1,0:T(1,128)}', space=vmem, size = 0x12000, scoped, tag = 'internal scratch']
  #allocation2 [shape = 'f32[8,256]{1,0:T(8,128)}', space=vmem, size = 0x2000, scoped, tag = 'scratch operand']
  #allocation3 [shape = 'f32[8,256]{1,0:T(8,128)}', space=vmem, size = 0x2000, scoped, tag = 'scratch operand']
  %s0 = inlined_call_operand.vmem [shape: s32[8,1], index: 0, kind: input, shape index: {}]
  %s1 = inlined_call_operand.hbm [shape: bf16[8,8,1024], index: 1, kind: input, shape index: {}]
  %s2 = inlined_call_operand.hbm [shape: bf16[8,8,1024], index: 2, kind: input, shape index: {}]
  %s3 = inlined_call_operand.hbm [shape: bf16[128,512], index: 3, kind: input, shape index: {}]
  %s4 = inlined_call_operand.hbm [shape: bf16[128,512], index: 4, kind: input, shape index: {}]
  %s5 = inlined_call_operand.hbm [shape: f32[8,256], index: 5, kind: output, shape index: {}]
  %s6 = sld [smem:[#allocation0]]
  $region61: #{tpu_custom_call.1} parent=0
    _
  %s8 = ssub.s32 1, %s6
  %s9 = scalar_select 0, %s8, %s6
  $region1: #{tpu_custom_call.1} parent=0
    #allocation4 [shape = 'u8[65536]{0}', space=vmem, size = 0x10000, scoped, tag = 'input window, operand 1, single buffered']
    #allocation5 [shape = 's32[1]{0}', space=sflag, size = 0x4, scoped, tag = 'scoped memory for tpu_custom_call.1']
    #allocation6 [shape = 's32[1]{0}', space=sflag, size = 0x4, scoped, tag = 'scoped memory for tpu_custom_call.1']
    #allocation7 [shape = 'u8[65536]{0}', space=vmem, size = 0x10000, scoped, tag = 'input window, operand 2, single buffered']
    #allocation8 [shape = 's32[1]{0}', space=sflag, size = 0x4, scoped, tag = 'scoped memory for tpu_custom_call.1']
    #allocation9 [shape = 'u8[131072]{0}', space=vmem, size = 0x20000, scoped, tag = 'input window, operand 3, single buffered']
    #allocation10 [shape = 'u8[131072]{0}', space=vmem, size = 0x20000, scoped, tag = 'input window, operand 4, single buffered']
    #allocation11 [shape = 's32[1]{0}', space=sflag, size = 0x4, scoped, tag = 'scoped memory for tpu_custom_call.1']
    #allocation12 [shape = 'u8[8192]{0}', space=vmem, size = 0x2000, scoped, tag = 'output window, operand 0, single buffered']
    %10 = vsyncpa [#allocation5], 0
    %11 = vsyncpa [#allocation8], 0
    %12 = vsyncpa [#allocation11], 0
    %13 = vsyncpa [#allocation6], 0
    // Predicated region
    $region2: #{tpu_custom_call.1} parent=1 // pred_check
      _
    $region3: #{tpu_custom_call.1} parent=1 // pred_check_branch
      %15 = sbr.rel (0) target = $region5
    $region4: #{tpu_custom_call.1} parent=1 // pred_region
      _
    $region5: #{tpu_custom_call.1} parent=1 // pred_fallthru
      _
    // Predicated region
    $region6: #{tpu_custom_call.1} parent=1 // pred_check
      _
    $region7: #{tpu_custom_call.1} parent=1 // pred_check_branch
      %17 = sbr.rel (0) target = $region9
    $region8: #{tpu_custom_call.1} parent=1 // pred_region
      %s19 = ssub.s32 2048, 2048
      %20 = vsyncadd [#allocation5], %s19
      %s21 = sshll.u32 [#allocation4], 4
      %s22 = int_to_ptr.vmem [resolvable:$true] %s21
      %27 = dma.hbm_to_vmem [thread:$0]  %s1, 2048, %s22, [#allocation5], 512, 256, 16
    $region9: #{tpu_custom_call.1} parent=1 // pred_fallthru
      _
    // Predicated region
    $region10: #{tpu_custom_call.1} parent=1 // pred_check
      _
    $region11: #{tpu_custom_call.1} parent=1 // pred_check_branch
      %29 = sbr.rel (0) target = $region13
    $region12: #{tpu_custom_call.1} parent=1 // pred_region
      %s30 = ssub.s32 0, 0
      %s31 = smul.u32 8, %s30
      %s33 = ssub.s32 2048, 2048
      %34 = vsyncadd [#allocation8], %s33
      %s35 = smul.addr %s31, 8
      %s36 = sadd.s32 4, %s35
      %s37 = smul.addr %s36, 64
      %s38 = scalar_lea.hbm %s2, %s37
      %s39 = sshll.u32 [#allocation7], 4
      %s40 = int_to_ptr.vmem [resolvable:$true] %s39
      %45 = dma.hbm_to_vmem [thread:$0]  %s38, 2048, %s40, [#allocation8], 512, 256, 16
    $region13: #{tpu_custom_call.1} parent=1 // pred_fallthru
      _
    // Predicated region
    $region14: #{tpu_custom_call.1} parent=1 // pred_check
      _
    $region15: #{tpu_custom_call.1} parent=1 // pred_check_branch
      %47 = sbr.rel (0) target = $region17
    $region16: #{tpu_custom_call.1} parent=1 // pred_region
      %s49 = ssub.s32 4096, 4096
      %50 = vsyncadd [#allocation8], %s49
      %s51 = sshll.u32 [#allocation9], 4
      %s52 = int_to_ptr.vmem [resolvable:$true] %s51
      %57 = dma.hbm_to_vmem [thread:$0]  %s3, 4096, %s52, [#allocation8], 256, 256, 16
    $region17: #{tpu_custom_call.1} parent=1 // pred_fallthru
      _
    // Predicated region
    $region18: #{tpu_custom_call.1} parent=1 // pred_check
      _
    $region19: #{tpu_custom_call.1} parent=1 // pred_check_branch
      %59 = sbr.rel (0) target = $region21
    $region20: #{tpu_custom_call.1} parent=1 // pred_region
      %s61 = ssub.s32 4096, 4096
      %62 = vsyncadd [#allocation11], %s61
      %s63 = sshll.u32 [#allocation10], 4
      %s64 = int_to_ptr.vmem [resolvable:$true] %s63
      %69 = dma.hbm_to_vmem [thread:$0]  %s4, 4096, %s64, [#allocation11], 256, 256, 16
    $region21: #{tpu_custom_call.1} parent=1 // pred_fallthru
      _
    // Predicated region
    $region22: #{tpu_custom_call.1} parent=1 // pred_check
      _
    $region23: #{tpu_custom_call.1} parent=1 // pred_check_branch
      %71 = sbr.rel (0) target = $region25
    $region24: #{tpu_custom_call.1} parent=1 // pred_region
      %72 = dma.done [#allocation5], 2048
    $region25: #{tpu_custom_call.1} parent=1 // pred_fallthru
      _
    // Predicated region
    $region26: #{tpu_custom_call.1} parent=1 // pred_check
      _
    $region27: #{tpu_custom_call.1} parent=1 // pred_check_branch
      %74 = sbr.rel (0) target = $region29
    $region28: #{tpu_custom_call.1} parent=1 // pred_region
      %75 = dma.done [#allocation8], 2048
    $region29: #{tpu_custom_call.1} parent=1 // pred_fallthru
      _
    // Predicated region
    $region30: #{tpu_custom_call.1} parent=1 // pred_check
      _
    $region31: #{tpu_custom_call.1} parent=1 // pred_check_branch
      %77 = sbr.rel (0) target = $region33
    $region32: #{tpu_custom_call.1} parent=1 // pred_region
      %78 = dma.done [#allocation8], 4096
    $region33: #{tpu_custom_call.1} parent=1 // pred_fallthru
      _
    // Predicated region
    $region34: #{tpu_custom_call.1} parent=1 // pred_check
      _
    $region35: #{tpu_custom_call.1} parent=1 // pred_check_branch
      %80 = sbr.rel (0) target = $region37
    $region36: #{tpu_custom_call.1} parent=1 // pred_region
      %81 = dma.done [#allocation11], 4096
    $region37: #{tpu_custom_call.1} parent=1 // pred_fallthru
      _
    %s82 = ssub.s32 0, 0
    %s83 = smul.u32 8, %s82
    %p85 = scmp.eq.s32.totalorder 0, 0
    // Predicated region
    $region38: #{tpu_custom_call.1} parent=1 // pred_check
      %p86 = pneg %p85
    $region39: #{tpu_custom_call.1} parent=1 // pred_check_branch
      %88 = sbr.rel (%p86) target = $region41
    $region40: #{tpu_custom_call.1} parent=1 // pred_region
      %89 = vst [vmem:[#allocation2] sm:$0xff] 0.0
      %90 = vst [vmem:[#allocation2 + $0x8] sm:$0xff] 0.0
      %91 = vst [vmem:[#allocation3] sm:$0xff] 0.0
      %92 = vst [vmem:[#allocation3 + $0x8] sm:$0xff] 0.0
    $region41: #{tpu_custom_call.1} parent=1 // pred_fallthru
      _
    %v93 = vld [vmem:[%s0] sm:$0xff]
    %s94 = smul.u32 0, 8
    loop: start=0, step=1, limit=8
    $region42: #{tpu_custom_call.1} parent=1 // loop_pre_header
      _
    $region43: #{tpu_custom_call.1} parent=1 // loop_header
      %s96 = sphi 0, %s100
      %p97 = scmp.ge.s32.totalorder %s96, 8
    $region44: #{tpu_custom_call.1} parent=1 // loop_header_branch
      %99 = sbr.rel (%p97) target = $region48
    $region45: #{tpu_custom_call.1} parent=1 // loop_body
      %s101 = sadd.s32 %s94, %s96
      %s102 = ssub.s32 7, %s101
      %s103 = smul.u32 %s96, 4
      %s104 = smul.addr %s103, 4
      %s105 = scalar_lea.vmem [#allocation4], %s104
      %v106 = vld [vmem:[%s105] sm:$0xff]
      %v107 = vld [vmem:[%s105 + $0x8] sm:$0xff]
      %v108 = vld [vmem:[#allocation2] sm:$0xff]
      %v109 = vld [vmem:[#allocation3] sm:$0xff]
      %v110 = vunpack.c.l.bf16 %v106
      %v111 = vunpack.c.h.bf16 %v106
      %v112 = vunpack.c.l.bf16 %v107
      %v113 = vunpack.c.h.bf16 %v107
      %v114 = vpack.c.bf16 %v108, %v108
      %v115 = vld [vmem:[#allocation9] sm:$0xff]
      %v116 = vld [vmem:[#allocation9 + $0x8] sm:$0xff]
      %v117 = vld [vmem:[#allocation9 + $0x10] sm:$0xff]
      %v118 = vld [vmem:[#allocation9 + $0x18] sm:$0xff]
      %v119 = vld [vmem:[#allocation9 + $0x20] sm:$0xff]
      %v120 = vld [vmem:[#allocation9 + $0x28] sm:$0xff]
      %v121 = vld [vmem:[#allocation9 + $0x30] sm:$0xff]
      %v122 = vld [vmem:[#allocation9 + $0x38] sm:$0xff]
      %v123 = vld [vmem:[#allocation9 + $0x40] sm:$0xff]
      %v124 = vld [vmem:[#allocation9 + $0x48] sm:$0xff]
      %v125 = vld [vmem:[#allocation9 + $0x50] sm:$0xff]
      %v126 = vld [vmem:[#allocation9 + $0x58] sm:$0xff]
      %v127 = vld [vmem:[#allocation9 + $0x60] sm:$0xff]
      %v128 = vld [vmem:[#allocation9 + $0x68] sm:$0xff]
      %v129 = vld [vmem:[#allocation9 + $0x70] sm:$0xff]
      %v130 = vld [vmem:[#allocation9 + $0x78] sm:$0xff]
      %v131 = vld [vmem:[#allocation9 + $0x80] sm:$0xff]
      %v132 = vld [vmem:[#allocation9 + $0x88] sm:$0xff]
      %v133 = vld [vmem:[#allocation9 + $0x90] sm:$0xff]
      %v134 = vld [vmem:[#allocation9 + $0x98] sm:$0xff]
      %v135 = vld [vmem:[#allocation9 + $0xa0] sm:$0xff]
      %v136 = vld [vmem:[#allocation9 + $0xa8] sm:$0xff]
      %v137 = vld [vmem:[#allocation9 + $0xb0] sm:$0xff]
      %v138 = vld [vmem:[#allocation9 + $0xb8] sm:$0xff]
      %v139 = vld [vmem:[#allocation9 + $0xc0] sm:$0xff]
      %v140 = vld [vmem:[#allocation9 + $0xc8] sm:$0xff]
      %v141 = vld [vmem:[#allocation9 + $0xd0] sm:$0xff]
      %v142 = vld [vmem:[#allocation9 + $0xd8] sm:$0xff]
      %v143 = vld [vmem:[#allocation9 + $0xe0] sm:$0xff]
      %v144 = vld [vmem:[#allocation9 + $0xe8] sm:$0xff]
      %v145 = vld [vmem:[#allocation9 + $0xf0] sm:$0xff]
      %v146 = vld [vmem:[#allocation9 + $0xf8] sm:$0xff]
      %v179 = vunpack.c.l.b16 %v115
      %v180 = vunpack.c.h.b16 %v115
      %v181 = vunpack.c.l.b16 %v116
      %v182 = vunpack.c.h.b16 %v116
      %v183 = vunpack.c.l.b16 %v117
      %v184 = vunpack.c.h.b16 %v117
      %v185 = vunpack.c.l.b16 %v118
      %v186 = vunpack.c.h.b16 %v118
      %v187 = vunpack.c.l.b16 %v119
      %v188 = vunpack.c.h.b16 %v119
      %v189 = vunpack.c.l.b16 %v120
      %v190 = vunpack.c.h.b16 %v120
      %v191 = vunpack.c.l.b16 %v121
      %v192 = vunpack.c.h.b16 %v121
      %v193 = vunpack.c.l.b16 %v122
      %v194 = vunpack.c.h.b16 %v122
      %v195 = vunpack.c.l.b16 %v123
      %v196 = vunpack.c.h.b16 %v123
      %v197 = vunpack.c.l.b16 %v124
      %v198 = vunpack.c.h.b16 %v124
      %v199 = vunpack.c.l.b16 %v125
      %v200 = vunpack.c.h.b16 %v125
      %v201 = vunpack.c.l.b16 %v126
      %v202 = vunpack.c.h.b16 %v126
      %v203 = vunpack.c.l.b16 %v127
      %v204 = vunpack.c.h.b16 %v127
      %v205 = vunpack.c.l.b16 %v128
      %v206 = vunpack.c.h.b16 %v128
      %v207 = vunpack.c.l.b16 %v129
      %v208 = vunpack.c.h.b16 %v129
      %v209 = vunpack.c.l.b16 %v130
      %v210 = vunpack.c.h.b16 %v130
      %v211 = vunpack.c.l.b16 %v131
      %v212 = vunpack.c.h.b16 %v131
      %v213 = vunpack.c.l.b16 %v132
      %v214 = vunpack.c.h.b16 %v132
      %v215 = vunpack.c.l.b16 %v133
      %v216 = vunpack.c.h.b16 %v133
      %v217 = vunpack.c.l.b16 %v134
      %v218 = vunpack.c.h.b16 %v134
      %v219 = vunpack.c.l.b16 %v135
      %v220 = vunpack.c.h.b16 %v135
      %v221 = vunpack.c.l.b16 %v136
      %v222 = vunpack.c.h.b16 %v136
      %v223 = vunpack.c.l.b16 %v137
      %v224 = vunpack.c.h.b16 %v137
      %v225 = vunpack.c.l.b16 %v138
      %v226 = vunpack.c.h.b16 %v138
      %v227 = vunpack.c.l.b16 %v139
      %v228 = vunpack.c.h.b16 %v139
      %v229 = vunpack.c.l.b16 %v140
      %v230 = vunpack.c.h.b16 %v140
      %v231 = vunpack.c.l.b16 %v141
      %v232 = vunpack.c.h.b16 %v141
      %v233 = vunpack.c.l.b16 %v142
      %v234 = vunpack.c.h.b16 %v142
      %v235 = vunpack.c.l.b16 %v143
      %v236 = vunpack.c.h.b16 %v143
      %v237 = vunpack.c.l.b16 %v144
      %v238 = vunpack.c.h.b16 %v144
      %v239 = vunpack.c.l.b16 %v145
      %v240 = vunpack.c.h.b16 %v145
      %v241 = vunpack.c.l.b16 %v146
      %v242 = vunpack.c.h.b16 %v146
      %v243 = vpack.c.b16 %v183, %v179
      %v244 = vpack.c.b16 %v184, %v180
      %v245 = vpack.c.b16 %v185, %v181
      %v246 = vpack.c.b16 %v186, %v182
      %v247 = vpack.c.b16 %v191, %v187
      %v248 = vpack.c.b16 %v192, %v188
      %v249 = vpack.c.b16 %v193, %v189
      %v250 = vpack.c.b16 %v194, %v190
      %v251 = vpack.c.b16 %v199, %v195
      %v252 = vpack.c.b16 %v200, %v196
      %v253 = vpack.c.b16 %v201, %v197
      %v254 = vpack.c.b16 %v202, %v198
      %v255 = vpack.c.b16 %v207, %v203
      %v256 = vpack.c.b16 %v208, %v204
      %v257 = vpack.c.b16 %v209, %v205
      %v258 = vpack.c.b16 %v210, %v206
      %v259 = vpack.c.b16 %v215, %v211
      %v260 = vpack.c.b16 %v216, %v212
      %v261 = vpack.c.b16 %v217, %v213
      %v262 = vpack.c.b16 %v218, %v214
      %v263 = vpack.c.b16 %v223, %v219
      %v264 = vpack.c.b16 %v224, %v220
      %v265 = vpack.c.b16 %v225, %v221
      %v266 = vpack.c.b16 %v226, %v222
      %v267 = vpack.c.b16 %v231, %v227
      %v268 = vpack.c.b16 %v232, %v228
      %v269 = vpack.c.b16 %v233, %v229
      %v270 = vpack.c.b16 %v234, %v230
      %v271 = vpack.c.b16 %v239, %v235
      %v272 = vpack.c.b16 %v240, %v236
      %v273 = vpack.c.b16 %v241, %v237
      %v274 = vpack.c.b16 %v242, %v238
      %307 = vmatprep.subr.bf16.mxu0 %v272
      %308 = vmatpush1.bf16.msra.mxu0 %v271
      %309 = vmatprep.subr.bf16.mxu0 %v268
      %310 = vmatpush1.bf16.msra.mxu0 %v267
      %311 = vmatprep.subr.bf16.mxu0 %v264
      %312 = vmatpush1.bf16.msra.mxu0 %v263
      %313 = vmatprep.subr.bf16.mxu0 %v260
      %314 = vmatpush1.bf16.msra.mxu0 %v259
      %315 = vmatprep.subr.bf16.mxu0 %v256
      %316 = vmatpush1.bf16.msra.mxu0 %v255
      %317 = vmatprep.subr.bf16.mxu0 %v252
      %318 = vmatpush1.bf16.msra.mxu0 %v251
      %319 = vmatprep.subr.bf16.mxu0 %v248
      %320 = vmatpush1.bf16.msra.mxu0 %v247
      %321 = vmatprep.subr.bf16.mxu0 %v244
      %322 = vmatpush1.bf16.msra.mxu0 %v243
      %323 = vmatprep.subr.bf16.mxu0 0
      %324 = vmatpush2.bf16.msra.mxu0 0
      %325 = vmatprep.subr.bf16.mxu0 0
      %326 = vmatpush2.bf16.msra.mxu0 0
      %327 = vmatprep.subr.bf16.mxu0 0
      %328 = vmatpush2.bf16.msra.mxu0 0
      %329 = vmatprep.subr.bf16.mxu0 0
      %330 = vmatpush2.bf16.msra.mxu0 0
      %331 = vmatprep.subr.bf16.mxu0 0
      %332 = vmatpush2.bf16.msra.mxu0 0
      %333 = vmatprep.subr.bf16.mxu0 0
      %334 = vmatpush2.bf16.msra.mxu0 0
      %335 = vmatprep.subr.bf16.mxu0 0
      %336 = vmatpush2.bf16.msra.mxu0 0
      %337 = vmatprep.subr.bf16.mxu0 0
      %338 = vmatpush2.bf16.msra.mxu0 0
      %339 = vmatprep.mubr.bf16.mxu0 0
      %340 = vmatmul.mubr.bf16.gmra.mxu0 %v114
      %v341 = vpop.f32.mrf.mxu0
      %v342 = vadd.f32 0.0, %v341
      %v343 = vpop.f32.mrf.mxu0
      %v344 = vadd.f32 0.0, %v343
      %v345 = vpop.f32.mrf.mxu0
      %v346 = vpop.f32.mrf.mxu0
      %347 = vdwg.mxu0
      %348 = vmatprep.subr.bf16.mxu0 %v274
      %349 = vmatpush1.bf16.msra.mxu0 %v273
      %350 = vmatprep.subr.bf16.mxu0 %v270
      %351 = vmatpush1.bf16.msra.mxu0 %v269
      %352 = vmatprep.subr.bf16.mxu0 %v266
      %353 = vmatpush1.bf16.msra.mxu0 %v265
      %354 = vmatprep.subr.bf16.mxu0 %v262
      %355 = vmatpush1.bf16.msra.mxu0 %v261
      %356 = vmatprep.subr.bf16.mxu0 %v258
      %357 = vmatpush1.bf16.msra.mxu0 %v257
      %358 = vmatprep.subr.bf16.mxu0 %v254
      %359 = vmatpush1.bf16.msra.mxu0 %v253
      %360 = vmatprep.subr.bf16.mxu0 %v250
      %361 = vmatpush1.bf16.msra.mxu0 %v249
      %362 = vmatprep.subr.bf16.mxu0 %v246
      %363 = vmatpush1.bf16.msra.mxu0 %v245
      %364 = vmatprep.subr.bf16.mxu0 0
      %365 = vmatpush2.bf16.msra.mxu0 0
      %366 = vmatprep.subr.bf16.mxu0 0
      %367 = vmatpush2.bf16.msra.mxu0 0
      %368 = vmatprep.subr.bf16.mxu0 0
      %369 = vmatpush2.bf16.msra.mxu0 0
      %370 = vmatprep.subr.bf16.mxu0 0
      %371 = vmatpush2.bf16.msra.mxu0 0
      %372 = vmatprep.subr.bf16.mxu0 0
      %373 = vmatpush2.bf16.msra.mxu0 0
      %374 = vmatprep.subr.bf16.mxu0 0
      %375 = vmatpush2.bf16.msra.mxu0 0
      %376 = vmatprep.subr.bf16.mxu0 0
      %377 = vmatpush2.bf16.msra.mxu0 0
      %378 = vmatprep.subr.bf16.mxu0 0
      %379 = vmatpush2.bf16.msra.mxu0 0
      %380 = vmatprep.mubr.bf16.mxu0 0
      %381 = vmatmul.mubr.bf16.gmra.mxu0 %v114
      %v382 = vpop.f32.mrf.mxu0
      %v383 = vadd.f32 0.0, %v382
      %v384 = vpop.f32.mrf.mxu0
      %v385 = vadd.f32 0.0, %v384
      %v386 = vpop.f32.mrf.mxu0
      %v387 = vpop.f32.mrf.mxu0
      %388 = vdwg.mxu0
      %v389 = vadd.f32 %v110, %v342
      %v390 = vadd.f32 %v111, %v344
      %v391 = vadd.f32 %v112, %v383
      %v392 = vadd.f32 %v113, %v385
      %v393 = vxor.u32 %v389, 2147483648
      %v394 = vmul.f32 %v393, 1.442695
      %v395 = vpow.pop %v394
      %v396 = vadd.f32 %v395, 1.0
      %v397 = vrcp.pop %v396
      %v398 = vmul.f32 1.0, %v397
      %v399 = vxor.u32 %v390, 2147483648
      %v400 = vmul.f32 %v399, 1.442695
      %v401 = vpow.pop %v400
      %v402 = vadd.f32 %v401, 1.0
      %v403 = vrcp.pop %v402
      %v404 = vmul.f32 1.0, %v403
      %v405 = vtanh.pop %v391
      %v406 = vxor.u32 %v392, 2147483648
      %v407 = vmul.f32 %v406, 1.442695
      %v408 = vpow.pop %v407
      %v409 = vadd.f32 %v408, 1.0
      %v410 = vrcp.pop %v409
      %v411 = vmul.f32 1.0, %v410
      %v412 = vmul.f32 %v404, %v109
      %v413 = vmul.f32 %v398, %v405
      %v414 = vadd.f32 %v412, %v413
      %v415 = vtanh.pop %v414
      %v416 = vmul.f32 %v411, %v415
      %s417 = ssub.s32 7, %s96
      %s418 = smul.u32 %s417, 4
      %s419 = smul.addr %s418, 4
      %s420 = scalar_lea.vmem [#allocation7], %s419
      %v421 = vld [vmem:[%s420] sm:$0xff]
      %v422 = vld [vmem:[%s420 + $0x8] sm:$0xff]
      %v423 = vld [vmem:[#allocation2 + $0x8] sm:$0xff]
      %v424 = vld [vmem:[#allocation3 + $0x8] sm:$0xff]
      %v425 = vunpack.c.l.bf16 %v421
      %v426 = vunpack.c.h.bf16 %v421
      %v427 = vunpack.c.l.bf16 %v422
      %v428 = vunpack.c.h.bf16 %v422
      %v429 = vpack.c.bf16 %v423, %v423
      %v430 = vld [vmem:[#allocation10] sm:$0xff]
      %v431 = vld [vmem:[#allocation10 + $0x8] sm:$0xff]
      %v432 = vld [vmem:[#allocation10 + $0x10] sm:$0xff]
      %v433 = vld [vmem:[#allocation10 + $0x18] sm:$0xff]
      %v434 = vld [vmem:[#allocation10 + $0x20] sm:$0xff]
      %v435 = vld [vmem:[#allocation10 + $0x28] sm:$0xff]
      %v436 = vld [vmem:[#allocation10 + $0x30] sm:$0xff]
      %v437 = vld [vmem:[#allocation10 + $0x38] sm:$0xff]
      %v438 = vld [vmem:[#allocation10 + $0x40] sm:$0xff]
      %v439 = vld [vmem:[#allocation10 + $0x48] sm:$0xff]
      %v440 = vld [vmem:[#allocation10 + $0x50] sm:$0xff]
      %v441 = vld [vmem:[#allocation10 + $0x58] sm:$0xff]
      %v442 = vld [vmem:[#allocation10 + $0x60] sm:$0xff]
      %v443 = vld [vmem:[#allocation10 + $0x68] sm:$0xff]
      %v444 = vld [vmem:[#allocation10 + $0x70] sm:$0xff]
      %v445 = vld [vmem:[#allocation10 + $0x78] sm:$0xff]
      %v446 = vld [vmem:[#allocation10 + $0x80] sm:$0xff]
      %v447 = vld [vmem:[#allocation10 + $0x88] sm:$0xff]
      %v448 = vld [vmem:[#allocation10 + $0x90] sm:$0xff]
      %v449 = vld [vmem:[#allocation10 + $0x98] sm:$0xff]
      %v450 = vld [vmem:[#allocation10 + $0xa0] sm:$0xff]
      %v451 = vld [vmem:[#allocation10 + $0xa8] sm:$0xff]
      %v452 = vld [vmem:[#allocation10 + $0xb0] sm:$0xff]
      %v453 = vld [vmem:[#allocation10 + $0xb8] sm:$0xff]
      %v454 = vld [vmem:[#allocation10 + $0xc0] sm:$0xff]
      %v455 = vld [vmem:[#allocation10 + $0xc8] sm:$0xff]
      %v456 = vld [vmem:[#allocation10 + $0xd0] sm:$0xff]
      %v457 = vld [vmem:[#allocation10 + $0xd8] sm:$0xff]
      %v458 = vld [vmem:[#allocation10 + $0xe0] sm:$0xff]
      %v459 = vld [vmem:[#allocation10 + $0xe8] sm:$0xff]
      %v460 = vld [vmem:[#allocation10 + $0xf0] sm:$0xff]
      %v461 = vld [vmem:[#allocation10 + $0xf8] sm:$0xff]
      %v494 = vunpack.c.l.b16 %v430
      %v495 = vunpack.c.h.b16 %v430
      %v496 = vunpack.c.l.b16 %v431
      %v497 = vunpack.c.h.b16 %v431
      %v498 = vunpack.c.l.b16 %v432
      %v499 = vunpack.c.h.b16 %v432
      %v500 = vunpack.c.l.b16 %v433
      %v501 = vunpack.c.h.b16 %v433
      %v502 = vunpack.c.l.b16 %v434
      %v503 = vunpack.c.h.b16 %v434
      %v504 = vunpack.c.l.b16 %v435
      %v505 = vunpack.c.h.b16 %v435
      %v506 = vunpack.c.l.b16 %v436
      %v507 = vunpack.c.h.b16 %v436
      %v508 = vunpack.c.l.b16 %v437
      %v509 = vunpack.c.h.b16 %v437
      %v510 = vunpack.c.l.b16 %v438
      %v511 = vunpack.c.h.b16 %v438
      %v512 = vunpack.c.l.b16 %v439
      %v513 = vunpack.c.h.b16 %v439
      %v514 = vunpack.c.l.b16 %v440
      %v515 = vunpack.c.h.b16 %v440
      %v516 = vunpack.c.l.b16 %v441
      %v517 = vunpack.c.h.b16 %v441
      %v518 = vunpack.c.l.b16 %v442
      %v519 = vunpack.c.h.b16 %v442
      %v520 = vunpack.c.l.b16 %v443
      %v521 = vunpack.c.h.b16 %v443
      %v522 = vunpack.c.l.b16 %v444
      %v523 = vunpack.c.h.b16 %v444
      %v524 = vunpack.c.l.b16 %v445
      %v525 = vunpack.c.h.b16 %v445
      %v526 = vunpack.c.l.b16 %v446
      %v527 = vunpack.c.h.b16 %v446
      %v528 = vunpack.c.l.b16 %v447
      %v529 = vunpack.c.h.b16 %v447
      %v530 = vunpack.c.l.b16 %v448
      %v531 = vunpack.c.h.b16 %v448
      %v532 = vunpack.c.l.b16 %v449
      %v533 = vunpack.c.h.b16 %v449
      %v534 = vunpack.c.l.b16 %v450
      %v535 = vunpack.c.h.b16 %v450
      %v536 = vunpack.c.l.b16 %v451
      %v537 = vunpack.c.h.b16 %v451
      %v538 = vunpack.c.l.b16 %v452
      %v539 = vunpack.c.h.b16 %v452
      %v540 = vunpack.c.l.b16 %v453
      %v541 = vunpack.c.h.b16 %v453
      %v542 = vunpack.c.l.b16 %v454
      %v543 = vunpack.c.h.b16 %v454
      %v544 = vunpack.c.l.b16 %v455
      %v545 = vunpack.c.h.b16 %v455
      %v546 = vunpack.c.l.b16 %v456
      %v547 = vunpack.c.h.b16 %v456
      %v548 = vunpack.c.l.b16 %v457
      %v549 = vunpack.c.h.b16 %v457
      %v550 = vunpack.c.l.b16 %v458
      %v551 = vunpack.c.h.b16 %v458
      %v552 = vunpack.c.l.b16 %v459
      %v553 = vunpack.c.h.b16 %v459
      %v554 = vunpack.c.l.b16 %v460
      %v555 = vunpack.c.h.b16 %v460
      %v556 = vunpack.c.l.b16 %v461
      %v557 = vunpack.c.h.b16 %v461
      %v558 = vpack.c.b16 %v498, %v494
      %v559 = vpack.c.b16 %v499, %v495
      %v560 = vpack.c.b16 %v500, %v496
      %v561 = vpack.c.b16 %v501, %v497
      %v562 = vpack.c.b16 %v506, %v502
      %v563 = vpack.c.b16 %v507, %v503
      %v564 = vpack.c.b16 %v508, %v504
      %v565 = vpack.c.b16 %v509, %v505
      %v566 = vpack.c.b16 %v514, %v510
      %v567 = vpack.c.b16 %v515, %v511
      %v568 = vpack.c.b16 %v516, %v512
      %v569 = vpack.c.b16 %v517, %v513
      %v570 = vpack.c.b16 %v522, %v518
      %v571 = vpack.c.b16 %v523, %v519
      %v572 = vpack.c.b16 %v524, %v520
      %v573 = vpack.c.b16 %v525, %v521
      %v574 = vpack.c.b16 %v530, %v526
      %v575 = vpack.c.b16 %v531, %v527
      %v576 = vpack.c.b16 %v532, %v528
      %v577 = vpack.c.b16 %v533, %v529
      %v578 = vpack.c.b16 %v538, %v534
      %v579 = vpack.c.b16 %v539, %v535
      %v580 = vpack.c.b16 %v540, %v536
      %v581 = vpack.c.b16 %v541, %v537
      %v582 = vpack.c.b16 %v546, %v542
      %v583 = vpack.c.b16 %v547, %v543
      %v584 = vpack.c.b16 %v548, %v544
      %v585 = vpack.c.b16 %v549, %v545
      %v586 = vpack.c.b16 %v554, %v550
      %v587 = vpack.c.b16 %v555, %v551
      %v588 = vpack.c.b16 %v556, %v552
      %v589 = vpack.c.b16 %v557, %v553
      %622 = vmatprep.subr.bf16.mxu0 %v587
      %623 = vmatpush1.bf16.msra.mxu0 %v586
      %624 = vmatprep.subr.bf16.mxu0 %v583
      %625 = vmatpush1.bf16.msra.mxu0 %v582
      %626 = vmatprep.subr.bf16.mxu0 %v579
      %627 = vmatpush1.bf16.msra.mxu0 %v578
      %628 = vmatprep.subr.bf16.mxu0 %v575
      %629 = vmatpush1.bf16.msra.mxu0 %v574
      %630 = vmatprep.subr.bf16.mxu0 %v571
      %631 = vmatpush1.bf16.msra.mxu0 %v570
      %632 = vmatprep.subr.bf16.mxu0 %v567
      %633 = vmatpush1.bf16.msra.mxu0 %v566
      %634 = vmatprep.subr.bf16.mxu0 %v563
      %635 = vmatpush1.bf16.msra.mxu0 %v562
      %636 = vmatprep.subr.bf16.mxu0 %v559
      %637 = vmatpush1.bf16.msra.mxu0 %v558
      %638 = vmatprep.subr.bf16.mxu0 0
      %639 = vmatpush2.bf16.msra.mxu0 0
      %640 = vmatprep.subr.bf16.mxu0 0
      %641 = vmatpush2.bf16.msra.mxu0 0
      %642 = vmatprep.subr.bf16.mxu0 0
      %643 = vmatpush2.bf16.msra.mxu0 0
      %644 = vmatprep.subr.bf16.mxu0 0
      %645 = vmatpush2.bf16.msra.mxu0 0
      %646 = vmatprep.subr.bf16.mxu0 0
      %647 = vmatpush2.bf16.msra.mxu0 0
      %648 = vmatprep.subr.bf16.mxu0 0
      %649 = vmatpush2.bf16.msra.mxu0 0
      %650 = vmatprep.subr.bf16.mxu0 0
      %651 = vmatpush2.bf16.msra.mxu0 0
      %652 = vmatprep.subr.bf16.mxu0 0
      %653 = vmatpush2.bf16.msra.mxu0 0
      %654 = vmatprep.mubr.bf16.mxu0 0
      %655 = vmatmul.mubr.bf16.gmra.mxu0 %v429
      %v656 = vpop.f32.mrf.mxu0
      %v657 = vadd.f32 0.0, %v656
      %v658 = vpop.f32.mrf.mxu0
      %v659 = vadd.f32 0.0, %v658
      %v660 = vpop.f32.mrf.mxu0
      %v661 = vpop.f32.mrf.mxu0
      %662 = vdwg.mxu0
      %663 = vmatprep.subr.bf16.mxu0 %v589
      %664 = vmatpush1.bf16.msra.mxu0 %v588
      %665 = vmatprep.subr.bf16.mxu0 %v585
      %666 = vmatpush1.bf16.msra.mxu0 %v584
      %667 = vmatprep.subr.bf16.mxu0 %v581
      %668 = vmatpush1.bf16.msra.mxu0 %v580
      %669 = vmatprep.subr.bf16.mxu0 %v577
      %670 = vmatpush1.bf16.msra.mxu0 %v576
      %671 = vmatprep.subr.bf16.mxu0 %v573
      %672 = vmatpush1.bf16.msra.mxu0 %v572
      %673 = vmatprep.subr.bf16.mxu0 %v569
      %674 = vmatpush1.bf16.msra.mxu0 %v568
      %675 = vmatprep.subr.bf16.mxu0 %v565
      %676 = vmatpush1.bf16.msra.mxu0 %v564
      %677 = vmatprep.subr.bf16.mxu0 %v561
      %678 = vmatpush1.bf16.msra.mxu0 %v560
      %679 = vmatprep.subr.bf16.mxu0 0
      %680 = vmatpush2.bf16.msra.mxu0 0
      %681 = vmatprep.subr.bf16.mxu0 0
      %682 = vmatpush2.bf16.msra.mxu0 0
      %683 = vmatprep.subr.bf16.mxu0 0
      %684 = vmatpush2.bf16.msra.mxu0 0
      %685 = vmatprep.subr.bf16.mxu0 0
      %686 = vmatpush2.bf16.msra.mxu0 0
      %687 = vmatprep.subr.bf16.mxu0 0
      %688 = vmatpush2.bf16.msra.mxu0 0
      %689 = vmatprep.subr.bf16.mxu0 0
      %690 = vmatpush2.bf16.msra.mxu0 0
      %691 = vmatprep.subr.bf16.mxu0 0
      %692 = vmatpush2.bf16.msra.mxu0 0
      %693 = vmatprep.subr.bf16.mxu0 0
      %694 = vmatpush2.bf16.msra.mxu0 0
      %695 = vmatprep.mubr.bf16.mxu0 0
      %696 = vmatmul.mubr.bf16.gmra.mxu0 %v429
      %v697 = vpop.f32.mrf.mxu0
      %v698 = vadd.f32 0.0, %v697
      %v699 = vpop.f32.mrf.mxu0
      %v700 = vadd.f32 0.0, %v699
      %v701 = vpop.f32.mrf.mxu0
      %v702 = vpop.f32.mrf.mxu0
      %703 = vdwg.mxu0
      %v704 = vadd.f32 %v425, %v657
      %v705 = vadd.f32 %v426, %v659
      %v706 = vadd.f32 %v427, %v698
      %v707 = vadd.f32 %v428, %v700
      %v708 = vxor.u32 %v704, 2147483648
      %v709 = vmul.f32 %v708, 1.442695
      %v710 = vpow.pop %v709
      %v711 = vadd.f32 %v710, 1.0
      %v712 = vrcp.pop %v711
      %v713 = vmul.f32 1.0, %v712
      %v714 = vxor.u32 %v705, 2147483648
      %v715 = vmul.f32 %v714, 1.442695
      %v716 = vpow.pop %v715
      %v717 = vadd.f32 %v716, 1.0
      %v718 = vrcp.pop %v717
      %v719 = vmul.f32 1.0, %v718
      %v720 = vtanh.pop %v706
      %v721 = vxor.u32 %v707, 2147483648
      %v722 = vmul.f32 %v721, 1.442695
      %v723 = vpow.pop %v722
      %v724 = vadd.f32 %v723, 1.0
      %v725 = vrcp.pop %v724
      %v726 = vmul.f32 1.0, %v725
      %v727 = vmul.f32 %v719, %v424
      %v728 = vmul.f32 %v713, %v720
      %v729 = vadd.f32 %v727, %v728
      %v730 = vtanh.pop %v729
      %v731 = vmul.f32 %v726, %v730
      %v732 = vstv %s101
      %vm733 = vcmp.lt.s32.totalorder %v732, %v93
      %v734 = vstv %s102
      %vm735 = vcmp.lt.s32.totalorder %v734, %v93
      %v736 = vsel %vm733, 1, 0
      %737 = vset.pattern.permute.xlu0 0
      %738 = vperm.xlu0 %737, %v736
      %v739 = vpop.permute.xlu0 %738
      %vm740 = vcmp.eq.s32.totalorder %v739, 1
      %v741 = vsel %vm740, %v416, %v108
      %742 = vst [vmem:[#allocation2] sm:$0xff] %v741
      %v743 = vld [vmem:[#allocation3] sm:$0xff]
      %v744 = vsel %vm740, %v414, %v743
      %745 = vst [vmem:[#allocation3] sm:$0xff] %v744
      %v746 = vld [vmem:[#allocation2 + $0x8] sm:$0xff]
      %v747 = vsel %vm735, 1, 0
      %748 = vset.pattern.permute.xlu0 0
      %749 = vperm.xlu0 %748, %v747
      %v750 = vpop.permute.xlu0 %749
      %vm751 = vcmp.eq.s32.totalorder %v750, 1
      %v752 = vsel %vm751, %v731, %v746
      %753 = vst [vmem:[#allocation2 + $0x8] sm:$0xff] %v752
      %v754 = vld [vmem:[#allocation3 + $0x8] sm:$0xff]
      %v755 = vsel %vm751, %v729, %v754
      %756 = vst [vmem:[#allocation3 + $0x8] sm:$0xff] %v755
    $region46: #{tpu_custom_call.1} parent=1 // loop_footer
      %s100 = sadd.s32 1, %s96
    $region47: #{tpu_custom_call.1} parent=1 // loop_footer_branch
      %95 = sbr.rel target = $region43
    $region48: #{tpu_custom_call.1} parent=1 // loop_exit
      _
    // Predicated region
    $region49: #{tpu_custom_call.1} parent=1 // pred_check
      %p757 = pneg %p85
    $region50: #{tpu_custom_call.1} parent=1 // pred_check_branch
      %759 = sbr.rel (%p757) target = $region52
    $region51: #{tpu_custom_call.1} parent=1 // pred_region
      %v760 = vld [vmem:[#allocation2] sm:$0xff]
      %v761 = vld [vmem:[#allocation2 + $0x8] sm:$0xff]
      %762 = vst [vmem:[#allocation12] sm:$0xff] %v760
      %763 = vst [vmem:[#allocation12 + $0x8] sm:$0xff] %v761
    $region52: #{tpu_custom_call.1} parent=1 // pred_fallthru
      _
    // Predicated region
    $region53: #{tpu_custom_call.1} parent=1 // pred_check
      _
    $region54: #{tpu_custom_call.1} parent=1 // pred_check_branch
      %765 = sbr.rel (0) target = $region56
    $region55: #{tpu_custom_call.1} parent=1 // pred_region
      %s767 = ssub.s32 256, 256
      %768 = vsyncadd [#allocation6], %s767
      %s770 = sshll.u32 [#allocation12], 4
      %s771 = int_to_ptr.vmem [resolvable:$true] %s770
      %773 = dma.vmem_to_hbm [thread:$0]  %s771, 256, %s5, [#allocation6]
    $region56: #{tpu_custom_call.1} parent=1 // pred_fallthru
      _
    // Predicated region
    $region57: #{tpu_custom_call.1} parent=1 // pred_check
      _
    $region58: #{tpu_custom_call.1} parent=1 // pred_check_branch
      %775 = sbr.rel (0) target = $region60
    $region59: #{tpu_custom_call.1} parent=1 // pred_region
      %776 = dma.done [#allocation6], 256
    $region60: #{tpu_custom_call.1} parent=1 // pred_fallthru
      _
    %777 = vsyncpa [#allocation5], 1
    %778 = vsyncpa [#allocation8], 1
    %779 = vsyncpa [#allocation11], 1
    %780 = vsyncpa [#allocation6], 1

</llo_original>
